<compile_context>
chip_gen: v6e
topology: v6e:2x2x1
jax: 0.10.0
libtpu: 0.0.40
codegen_flags: <defaults>
</compile_context>

<pallas_src>
import jax
import jax.numpy as jnp
from jax import lax
from jax.experimental import pallas as pl
from jax.experimental.pallas import tpu as pltpu

# ---- model hyperparameters (small synthetic config) -------------------------
VOCAB_SIZE   = 50
EMBED_DIM    = 32
FILTER_SIZES = (2, 3, 4)
N_FILTERS    = 16
DROPOUT      = 0.5           # inference-time dropout == identity
BATCH        = 2
SEQ_LEN      = 8

N_BRANCH  = len(FILTER_SIZES)
FS_MAX    = max(FILTER_SIZES)            # 4 -> K = FS_MAX * VOCAB_PAD = 256
VOCAB_PAD = 64                           # vocab padded with zero rows (keep K == 256)
PAD_IDX   = VOCAB_PAD - 1                # guaranteed-zero fused-weight row
C_OUT     = N_BRANCH * N_FILTERS         # 48 real conv channels
C_PAD     = 64                           # channels padded to a full half-lane multiple
BIAS_COL  = C_PAD - 1                    # constant-1 feature channel carrying the head bias
LANE      = 128                          # lane-dense output width
NEG_INF   = -1e30
BS        = BATCH * SEQ_LEN


def _cnn_classifier_kernel(tok_ref, w_ref, aux_ref, out_ref):
    """one-hot -> (gather+im2col+conv) in ONE matmul -> leaky_relu -> masked max -> VPU head."""
    tok = tok_ref[...]                                   # (BS, FS_MAX) i32, tap k offset by k*VOCAB_PAD

    # ---- one-hot over FS_MAX disjoint vocab blocks, built directly in bf16 ----
    iota = lax.broadcasted_iota(jnp.int32, (BS, FS_MAX * VOCAB_PAD), 1)
    onehot = tok[:, 0:1] == iota
    for k in range(1, FS_MAX):                           # static unroll, VPU only
        onehot = jnp.logical_or(onehot, tok[:, k:k + 1] == iota)
    onehot = onehot.astype(jnp.bfloat16)                 # single cast, no f32 intermediate

    # ---- THE matmul: embedding gather + im2col + all conv branches fused ------
    conv = jnp.dot(onehot, w_ref[...], preferred_element_type=jnp.float32)   # (BS, C_PAD) f32
    conv = conv + aux_ref[0:1, :]                        # conv bias (+1.0 at BIAS_COL)
    h = jnp.where(conv > 0, conv, 0.01 * conv)           # F.leaky_relu (slope 0.01), f32

    # ---- in-kernel validity mask (no DMA'd mask array) ------------------------
    # position l within a sequence is valid for branch i iff l < S - fs_i + 1
    pos = lax.broadcasted_iota(jnp.int32, (BS, C_PAD), 0) % SEQ_LEN
    col = lax.broadcasted_iota(jnp.int32, (BS, C_PAD), 1)
    limit = jnp.full((BS, C_PAD), SEQ_LEN, jnp.int32)    # padded channels: always valid
    for i, fs in enumerate(FILTER_SIZES):                # static unroll, 3 selects
        in_grp = jnp.logical_and(col >= i * N_FILTERS, col < (i + 1) * N_FILTERS)
        limit = jnp.where(in_grp, SEQ_LEN - fs + 1, limit)
    h = jnp.where(pos < limit, h, NEG_INF)

    # ---- max over sequence positions, per batch row (static unroll, B=2) ------
    # slices are sublane-tile aligned because SEQ_LEN == 8
    rows = [jnp.max(h[b * SEQ_LEN:(b + 1) * SEQ_LEN, :], axis=0, keepdims=True)
            for b in range(BATCH)]
    feat = jnp.concatenate(rows, axis=0)                 # (B, C_PAD); feat[:, BIAS_COL] == 1.0

    # dropout == identity at inference
    # ---- head on VPU/XLU: multiply + lane reduction (head cols beyond 48 are 0;
    #      the head bias rides the constant-1 channel at BIAS_COL) ---------------
    logit = jnp.sum(feat * aux_ref[1:2, :], axis=-1, keepdims=True)          # (B, 1)
    out_ref[...] = jnp.broadcast_to(logit, (BATCH, LANE))                    # lane-dense store


def init_params(key):
    n_branches = len(FILTER_SIZES)
    keys = jax.random.split(key, 2 * n_branches + 3)
    emb = 0.1 * jax.random.normal(keys[0], (VOCAB_SIZE, EMBED_DIM), jnp.float32)
    w_conv, b_conv = [], []
    for i, fs in enumerate(FILTER_SIZES):
        # PyTorch Conv2d weight (NF, E, fs, 1) stored here as (fs, E, NF)
        w_conv.append(0.1 * jax.random.normal(keys[1 + 2 * i],
                                              (fs, EMBED_DIM, N_FILTERS), jnp.float32))
        b_conv.append(0.1 * jax.random.normal(keys[2 + 2 * i],
                                              (1, N_FILTERS), jnp.float32))
    w_out = 0.1 * jax.random.normal(keys[-2], (n_branches * N_FILTERS, 1), jnp.float32)
    b_out = 0.1 * jax.random.normal(keys[-1], (1, 1), jnp.float32)
    return {"embedding": emb,
            "w_conv": tuple(w_conv), "b_conv": tuple(b_conv),
            "w_out": w_out, "b_out": b_out}


def pack_params(params):
    """One-time repack: fuse embedding + conv weights into a single bf16 MXU operand."""
    # embedding padded to VOCAB_PAD zero rows, block-diagonal over FS_MAX taps
    emb_pad = jnp.zeros((VOCAB_PAD, EMBED_DIM), jnp.float32).at[:VOCAB_SIZE].set(
        params["embedding"])
    emb_blk = jnp.kron(jnp.eye(FS_MAX, dtype=jnp.float32), emb_pad)          # (256, 128)

    # concatenated conv weight: taps k >= fs_i stay zero; channels padded to C_PAD
    w_cat = jnp.zeros((FS_MAX * EMBED_DIM, C_PAD), jnp.float32)
    for i, fs in enumerate(FILTER_SIZES):
        for k in range(fs):
            w_cat = w_cat.at[k * EMBED_DIM:(k + 1) * EMBED_DIM,
                             i * N_FILTERS:(i + 1) * N_FILTERS].set(params["w_conv"][i][k])

    # gather + im2col + conv are all linear with no nonlinearity in between:
    # precompute the product in f32, cast to bf16 exactly once.
    w_fused = (emb_blk @ w_cat).astype(jnp.bfloat16)                          # (256, C_PAD)

    # aux row 0: conv bias (with a constant-1 feature at BIAS_COL)
    # aux row 1: head weight row (head bias stored at BIAS_COL -> rides the 1-feature)
    aux = jnp.zeros((2, C_PAD), jnp.float32)
    for i, fs in enumerate(FILTER_SIZES):
        aux = aux.at[0, i * N_FILTERS:(i + 1) * N_FILTERS].set(params["b_conv"][i][0])
    aux = aux.at[0, BIAS_COL].set(1.0)
    aux = aux.at[1, :C_OUT].set(params["w_out"][:, 0])
    aux = aux.at[1, BIAS_COL].set(params["b_out"][0, 0])

    return {"w_fused": w_fused, "aux": aux}


@jax.jit
def cnn_classifier_forward(token_ids, packed):
    B, S = token_ids.shape
    # im2col on *indices* only (tiny int32 glue); the embedding gather itself
    # happens in-kernel as part of the single fused MXU matmul.
    pos   = jnp.arange(S)[:, None] + jnp.arange(FS_MAX)[None, :]              # (S, FS_MAX)
    valid = pos < S
    tok   = token_ids[:, jnp.clip(pos, 0, S - 1)]                             # (B, S, FS_MAX)
    tok   = jnp.where(valid[None, :, :], tok, PAD_IDX)                        # OOB -> zero fused row
    tok   = tok + (jnp.arange(FS_MAX) * VOCAB_PAD)[None, None, :]             # offset into tap block k
    tok   = tok.reshape(B * S, FS_MAX).astype(jnp.int32)

    vmem = pl.BlockSpec(memory_space=pltpu.MemorySpace.VMEM)
    # NOTE: whole problem fits a single VMEM block at B=2. If batch scales, add
    # a grid over batch with dimension_semantics=("parallel",) (2 TCs on v7x),
    # give w_fused/aux constant index_maps so they stay VMEM-resident, pick the
    # row tile >= 256 to fill v6e's 256x256 MXU, and size the batch tile
    # against v7x's 64 MiB physical VMEM (count 2x for double buffering).
    logits = pl.pallas_call(
        _cnn_classifier_kernel,
        out_shape=jax.ShapeDtypeStruct((B, LANE), jnp.float32),
        in_specs=[vmem] * 3,
        out_specs=vmem,
    )(tok, packed["w_fused"], packed["aux"])
    return logits[:, 0]                                                       # .squeeze(1) -> (B,)


def _reference_forward(token_ids, params):
    """Pure-JAX f32 reference mirroring the PyTorch forward (eval mode)."""
    x = jnp.take(params["embedding"], token_ids, axis=0)                      # (B, S, E)
    feats = []
    for w, b, fs in zip(params["w_conv"], params["b_conv"], FILTER_SIZES):
        L = SEQ_LEN - fs + 1
        acc = jnp.zeros((token_ids.shape[0], L, N_FILTERS), jnp.float32)
        for k in range(fs):
            acc = acc + jnp.einsum('ble,ef->blf', x[:, k:k + L, :], w[k])
        acc = acc + b.reshape(1, 1, N_FILTERS)
        h = jnp.where(acc > 0, acc, 0.01 * acc)
        feats.append(jnp.max(h, axis=1))
    feat = jnp.concatenate(feats, axis=-1)
    return (feat @ params["w_out"] + params["b_out"])[:, 0]


if __name__ == "__main__":
    key = jax.random.PRNGKey(0)
    k_tok, k_par = jax.random.split(key)
    token_ids = jax.random.randint(k_tok, (BATCH, SEQ_LEN), 0, VOCAB_SIZE, jnp.int32)
    params = init_params(k_par)
    packed = pack_params(params)

    out = cnn_classifier_forward(token_ids, packed)
    out = jax.block_until_ready(out)

    ref = _reference_forward(token_ids, params)
    assert out.shape == (BATCH,)
    # bf16 fused weight -> slightly looser tolerance than pure f32
    assert jnp.allclose(out, ref, atol=2e-2, rtol=2e-2), (out, ref)

    print("KERNEL_OK")
</pallas_src>

<mosaic_0001>
module attributes {stable_mosaic.version = 11 : i64} {
  func.func @_cnn_classifier_kernel(%arg0: memref<16x4xi32, #tpu.memory_space<vmem>>, %arg1: memref<256x64xbf16, #tpu.memory_space<vmem>>, %arg2: memref<2x64xf32, #tpu.memory_space<vmem>>, %arg3: memref<2x128xf32, #tpu.memory_space<vmem>>) attributes {dimension_semantics = [], scalar_prefetch = 0 : i64, scratch_operands = 0 : i64, tpu.core_type = #tpu.core_type<tc>} {
    %c0 = arith.constant 0 : index
    %c0_0 = arith.constant 0 : index
    %0 = vector.load %arg0[%c0, %c0_0] : memref<16x4xi32, #tpu.memory_space<vmem>>, vector<16x4xi32>
    %1 = tpu.iota {dimensions = array<i32: 1>} : vector<16x256xi32>
    %2 = vector.extract_strided_slice %0 {offsets = [0, 0], sizes = [16, 1], strides = [1, 1]} : vector<16x4xi32> to vector<16x1xi32>
    %3 = vector.broadcast %2 : vector<16x1xi32> to vector<16x256xi32>
    %4 = arith.cmpi eq, %3, %1 : vector<16x256xi32>
    %5 = vector.extract_strided_slice %0 {offsets = [0, 1], sizes = [16, 1], strides = [1, 1]} : vector<16x4xi32> to vector<16x1xi32>
    %6 = vector.broadcast %5 : vector<16x1xi32> to vector<16x256xi32>
    %7 = arith.cmpi eq, %6, %1 : vector<16x256xi32>
    %8 = arith.ori %4, %7 : vector<16x256xi1>
    %9 = vector.extract_strided_slice %0 {offsets = [0, 2], sizes = [16, 1], strides = [1, 1]} : vector<16x4xi32> to vector<16x1xi32>
    %10 = vector.broadcast %9 : vector<16x1xi32> to vector<16x256xi32>
    %11 = arith.cmpi eq, %10, %1 : vector<16x256xi32>
    %12 = arith.ori %8, %11 : vector<16x256xi1>
    %13 = vector.extract_strided_slice %0 {offsets = [0, 3], sizes = [16, 1], strides = [1, 1]} : vector<16x4xi32> to vector<16x1xi32>
    %14 = vector.broadcast %13 : vector<16x1xi32> to vector<16x256xi32>
    %15 = arith.cmpi eq, %14, %1 : vector<16x256xi32>
    %16 = arith.ori %12, %15 : vector<16x256xi1>
    %17 = arith.extui %16 : vector<16x256xi1> to vector<16x256xi32>
    %18 = arith.sitofp %17 : vector<16x256xi32> to vector<16x256xf32>
    %19 = arith.truncf %18 : vector<16x256xf32> to vector<16x256xbf16>
    %c0_1 = arith.constant 0 : index
    %c0_2 = arith.constant 0 : index
    %20 = vector.load %arg1[%c0_1, %c0_2] : memref<256x64xbf16, #tpu.memory_space<vmem>>, vector<256x64xbf16>
    %cst = arith.constant dense<0.000000e+00> : vector<16x64xf32>
    %21 = tpu.matmul %19, %20, %cst {dimension_numbers = #tpu.dot_dimension_numbers<[1], [0], [0], [1], [0, 0, 1, 1], [], []>} : vector<16x256xbf16>, vector<256x64xbf16>, vector<16x64xf32> -> vector<16x64xf32>
    %c0_3 = arith.constant 0 : index
    %c0_4 = arith.constant 0 : index
    %22 = vector.load %arg2[%c0_3, %c0_4] : memref<2x64xf32, #tpu.memory_space<vmem>>, vector<1x64xf32>
    %23 = vector.broadcast %22 : vector<1x64xf32> to vector<16x64xf32>
    %24 = arith.addf %21, %23 : vector<16x64xf32>
    %cst_5 = arith.constant 0.000000e+00 : f32
    %25 = vector.broadcast %cst_5 : f32 to vector<16x64xf32>
    %26 = arith.cmpf ogt, %24, %25 : vector<16x64xf32>
    %cst_6 = arith.constant 0.00999999977 : f32
    %27 = vector.broadcast %cst_6 : f32 to vector<16x64xf32>
    %28 = arith.mulf %27, %24 : vector<16x64xf32>
    %29 = arith.select %26, %24, %28 : vector<16x64xi1>, vector<16x64xf32>
    %30 = tpu.iota {dimensions = array<i32: 0>} : vector<16x64xi32>
    %c8_i32 = arith.constant 8 : i32
    %c0_i32 = arith.constant 0 : i32
    %31 = arith.cmpi eq, %c8_i32, %c0_i32 : i32
    %c1_i32 = arith.constant 1 : i32
    %32 = arith.select %31, %c1_i32, %c8_i32 : i32
    %33 = vector.broadcast %32 : i32 to vector<16x64xi32>
    %34 = arith.remsi %30, %33 : vector<16x64xi32>
    %c0_i32_7 = arith.constant 0 : i32
    %35 = vector.broadcast %c0_i32_7 : i32 to vector<16x64xi32>
    %36 = arith.cmpi ne, %34, %35 : vector<16x64xi32>
    %c0_i32_8 = arith.constant 0 : i32
    %37 = vector.broadcast %c0_i32_8 : i32 to vector<16x64xi32>
    %38 = arith.cmpi slt, %34, %37 : vector<16x64xi32>
    %c0_i32_9 = arith.constant 0 : i32
    %39 = arith.cmpi slt, %32, %c0_i32_9 : i32
    %40 = vector.broadcast %39 : i1 to vector<16x64xi1>
    %41 = vector.broadcast %40 : vector<16x64xi1> to vector<16x64xi1>
    %42 = arith.xori %38, %41 : vector<16x64xi1>
    %43 = arith.andi %42, %36 : vector<16x64xi1>
    %44 = vector.broadcast %32 : i32 to vector<16x64xi32>
    %45 = arith.addi %34, %44 : vector<16x64xi32>
    %46 = arith.select %43, %45, %34 : vector<16x64xi1>, vector<16x64xi32>
    %47 = tpu.iota {dimensions = array<i32: 1>} : vector<16x64xi32>
    %c8_i32_10 = arith.constant 8 : i32
    %48 = vector.broadcast %c8_i32_10 : i32 to vector<16x64xi32>
    %c0_i32_11 = arith.constant 0 : i32
    %49 = vector.broadcast %c0_i32_11 : i32 to vector<16x64xi32>
    %50 = arith.cmpi sge, %47, %49 : vector<16x64xi32>
    %c16_i32 = arith.constant 16 : i32
    %51 = vector.broadcast %c16_i32 : i32 to vector<16x64xi32>
    %52 = arith.cmpi slt, %47, %51 : vector<16x64xi32>
    %53 = arith.andi %50, %52 : vector<16x64xi1>
    %c7_i32 = arith.constant 7 : i32
    %54 = vector.broadcast %c7_i32 : i32 to vector<16x64xi32>
    %55 = arith.select %53, %54, %48 : vector<16x64xi1>, vector<16x64xi32>
    %c16_i32_12 = arith.constant 16 : i32
    %56 = vector.broadcast %c16_i32_12 : i32 to vector<16x64xi32>
    %57 = arith.cmpi sge, %47, %56 : vector<16x64xi32>
    %c32_i32 = arith.constant 32 : i32
    %58 = vector.broadcast %c32_i32 : i32 to vector<16x64xi32>
    %59 = arith.cmpi slt, %47, %58 : vector<16x64xi32>
    %60 = arith.andi %57, %59 : vector<16x64xi1>
    %c6_i32 = arith.constant 6 : i32
    %61 = vector.broadcast %c6_i32 : i32 to vector<16x64xi32>
    %62 = arith.select %60, %61, %55 : vector<16x64xi1>, vector<16x64xi32>
    %c32_i32_13 = arith.constant 32 : i32
    %63 = vector.broadcast %c32_i32_13 : i32 to vector<16x64xi32>
    %64 = arith.cmpi sge, %47, %63 : vector<16x64xi32>
    %c48_i32 = arith.constant 48 : i32
    %65 = vector.broadcast %c48_i32 : i32 to vector<16x64xi32>
    %66 = arith.cmpi slt, %47, %65 : vector<16x64xi32>
    %67 = arith.andi %64, %66 : vector<16x64xi1>
    %c5_i32 = arith.constant 5 : i32
    %68 = vector.broadcast %c5_i32 : i32 to vector<16x64xi32>
    %69 = arith.select %67, %68, %62 : vector<16x64xi1>, vector<16x64xi32>
    %70 = arith.cmpi slt, %46, %69 : vector<16x64xi32>
    %cst_14 = arith.constant -1.000000e+30 : f32
    %71 = vector.broadcast %cst_14 : f32 to vector<16x64xf32>
    %72 = arith.select %70, %29, %71 : vector<16x64xi1>, vector<16x64xf32>
    %73 = vector.extract_strided_slice %72 {offsets = [0, 0], sizes = [8, 64], strides = [1, 1]} : vector<16x64xf32> to vector<8x64xf32>
    %cst_15 = arith.constant dense<0xFF800000> : vector<64xf32>
    %74 = vector.multi_reduction <maximumf>, %73, %cst_15 [0] : vector<8x64xf32> to vector<64xf32>
    %75 = vector.shape_cast %74 : vector<64xf32> to vector<1x64xf32>
    %76 = vector.extract_strided_slice %72 {offsets = [8, 0], sizes = [8, 64], strides = [1, 1]} : vector<16x64xf32> to vector<8x64xf32>
    %cst_16 = arith.constant dense<0xFF800000> : vector<64xf32>
    %77 = vector.multi_reduction <maximumf>, %76, %cst_16 [0] : vector<8x64xf32> to vector<64xf32>
    %78 = vector.shape_cast %77 : vector<64xf32> to vector<1x64xf32>
    %79 = tpu.concatenate %75, %78 in 0 : vector<1x64xf32>, vector<1x64xf32> -> vector<2x64xf32>
    %c1 = arith.constant 1 : index
    %c0_17 = arith.constant 0 : index
    %80 = vector.load %arg2[%c1, %c0_17] : memref<2x64xf32, #tpu.memory_space<vmem>>, vector<1x64xf32>
    %81 = vector.broadcast %80 : vector<1x64xf32> to vector<2x64xf32>
    %82 = arith.mulf %79, %81 : vector<2x64xf32>
    %cst_18 = arith.constant dense<0.000000e+00> : vector<2xf32>
    %83 = vector.multi_reduction <add>, %82, %cst_18 [1] : vector<2x64xf32> to vector<2xf32>
    %84 = vector.shape_cast %83 : vector<2xf32> to vector<2x1xf32>
    %85 = vector.shape_cast %84 : vector<2x1xf32> to vector<2x1xf32>
    %86 = vector.broadcast %85 : vector<2x1xf32> to vector<2x128xf32>
    %c0_19 = arith.constant 0 : index
    %c0_20 = arith.constant 0 : index
    %87 = vector.load %arg3[%c0_19, %c0_20] : memref<2x128xf32, #tpu.memory_space<vmem>>, vector<2x128xf32>
    tpu.vector_store %arg3[%c0_19, %c0_20], %86 {strides = array<i32>} : memref<2x128xf32, #tpu.memory_space<vmem>>, vector<2x128xf32>,
    return
  }
}

</mosaic_0001>

<llo_original>
// kernel: cnn_classifier_forward.1
$region0: #{cnn_classifier_forward.1}
  #allocation0 [shape = 'u32[]', space=smem, size = 0x4, offset = 0x4, fixed_abs, tag = 'smem constant byte address 0x4 - core index']
  #allocation1 [shape = 'u32[144,128]{1,0:T(1,128)}', space=vmem, size = 0x12000, scoped, tag = 'internal scratch']
  %s0 = inlined_call_operand.vmem [shape: s32[16,4], index: 0, kind: input, shape index: {}]
  %s1 = inlined_call_operand.vmem [shape: bf16[256,64], index: 1, kind: input, shape index: {}]
  %s2 = inlined_call_operand.vmem [shape: f32[2,64], index: 2, kind: input, shape index: {}]
  %s3 = inlined_call_operand.vmem [shape: f32[2,128], index: 3, kind: output, shape index: {}]
  %s4 = sld [smem:[#allocation0]]
  $region22: #{cnn_classifier_forward.1} parent=0
    _
  %s6 = ssub.s32 1, %s4
  %s7 = scalar_select 0, %s6, %s4
  // Predicated region
  $region2: #{cnn_classifier_forward.1} parent=0 // pred_check
    _
  $region3: #{cnn_classifier_forward.1} parent=0 // pred_check_branch
    %9 = sbr.rel (0) target = $region5
  $region4: #{cnn_classifier_forward.1} parent=0 // pred_region
    _
  $region5: #{cnn_classifier_forward.1} parent=0 // pred_fallthru
    _
  // Predicated region
  $region6: #{cnn_classifier_forward.1} parent=0 // pred_check
    _
  $region7: #{cnn_classifier_forward.1} parent=0 // pred_check_branch
    %11 = sbr.rel (0) target = $region9
  $region8: #{cnn_classifier_forward.1} parent=0 // pred_region
    _
  $region9: #{cnn_classifier_forward.1} parent=0 // pred_fallthru
    _
  // Predicated region
  $region10: #{cnn_classifier_forward.1} parent=0 // pred_check
    _
  $region11: #{cnn_classifier_forward.1} parent=0 // pred_check_branch
    %13 = sbr.rel (0) target = $region13
  $region12: #{cnn_classifier_forward.1} parent=0 // pred_region
    _
  $region13: #{cnn_classifier_forward.1} parent=0 // pred_fallthru
    _
  %v15 = vld [vmem:[%s0] sm:$0xff]
  %v16 = vld [vmem:[%s0 + $0x8] sm:$0xff]
  %v17 = vlaneseq
  %v18 = vand.u32 %v17, 127
  %v19 = vadd.s32 %v18, 128
  %20 = vset.pattern.permute.xlu0 0
  %21 = vperm.xlu0 %20, %v15
  %v22 = vpop.permute.xlu0 %21
  %23 = vset.pattern.permute.xlu0 0
  %24 = vperm.xlu0 %23, %v16
  %v25 = vpop.permute.xlu0 %24
  %vm26 = vcmp.eq.s32.totalorder %v22, %v18
  %vm27 = vcmp.eq.s32.totalorder %v22, %v19
  %vm28 = vcmp.eq.s32.totalorder %v25, %v18
  %vm29 = vcmp.eq.s32.totalorder %v25, %v19
  %30 = vset.pattern.permute.xlu0 1
  %31 = vperm.xlu0 %30, %v15
  %v32 = vpop.permute.xlu0 %31
  %33 = vset.pattern.permute.xlu0 1
  %34 = vperm.xlu0 %33, %v16
  %v35 = vpop.permute.xlu0 %34
  %vm36 = vcmp.eq.s32.totalorder %v32, %v18
  %vm37 = vcmp.eq.s32.totalorder %v32, %v19
  %vm38 = vcmp.eq.s32.totalorder %v35, %v18
  %vm39 = vcmp.eq.s32.totalorder %v35, %v19
  %vm40 = vmor %vm26, %vm36
  %vm41 = vmor %vm27, %vm37
  %vm42 = vmor %vm28, %vm38
  %vm43 = vmor %vm29, %vm39
  %44 = vset.pattern.permute.xlu0 2
  %45 = vperm.xlu0 %44, %v15
  %v46 = vpop.permute.xlu0 %45
  %47 = vset.pattern.permute.xlu0 2
  %48 = vperm.xlu0 %47, %v16
  %v49 = vpop.permute.xlu0 %48
  %vm50 = vcmp.eq.s32.totalorder %v46, %v18
  %vm51 = vcmp.eq.s32.totalorder %v46, %v19
  %vm52 = vcmp.eq.s32.totalorder %v49, %v18
  %vm53 = vcmp.eq.s32.totalorder %v49, %v19
  %vm54 = vmor %vm40, %vm50
  %vm55 = vmor %vm41, %vm51
  %vm56 = vmor %vm42, %vm52
  %vm57 = vmor %vm43, %vm53
  %58 = vset.pattern.permute.xlu0 3
  %59 = vperm.xlu0 %58, %v15
  %v60 = vpop.permute.xlu0 %59
  %61 = vset.pattern.permute.xlu0 3
  %62 = vperm.xlu0 %61, %v16
  %v63 = vpop.permute.xlu0 %62
  %vm64 = vcmp.eq.s32.totalorder %v60, %v18
  %vm65 = vcmp.eq.s32.totalorder %v60, %v19
  %vm66 = vcmp.eq.s32.totalorder %v63, %v18
  %vm67 = vcmp.eq.s32.totalorder %v63, %v19
  %vm68 = vmor %vm54, %vm64
  %vm69 = vmor %vm55, %vm65
  %vm70 = vmor %vm56, %vm66
  %vm71 = vmor %vm57, %vm67
  %v72 = vsel %vm68, 1, 0
  %v73 = vsel %vm69, 1, 0
  %v74 = vsel %vm70, 1, 0
  %v75 = vsel %vm71, 1, 0
  %v76 = vcvt.s32.f32 %v72
  %v77 = vcvt.s32.f32 %v73
  %v78 = vcvt.s32.f32 %v74
  %v79 = vcvt.s32.f32 %v75
  %v80 = vpack.c.bf16 %v78, %v76
  %v81 = vpack.c.bf16 %v79, %v77
  %v82 = vld [vmem:[%s1] sm:$0xf]
  %v83 = vld [vmem:[%s1 + $0x4] sm:$0xf]
  %v84 = vld [vmem:[%s1 + $0x8] sm:$0xf]
  %v85 = vld [vmem:[%s1 + $0xc] sm:$0xf]
  %v86 = vld [vmem:[%s1 + $0x10] sm:$0xf]
  %v87 = vld [vmem:[%s1 + $0x14] sm:$0xf]
  %v88 = vld [vmem:[%s1 + $0x18] sm:$0xf]
  %v89 = vld [vmem:[%s1 + $0x1c] sm:$0xf]
  %v90 = vld [vmem:[%s1 + $0x20] sm:$0xf]
  %v91 = vld [vmem:[%s1 + $0x24] sm:$0xf]
  %v92 = vld [vmem:[%s1 + $0x28] sm:$0xf]
  %v93 = vld [vmem:[%s1 + $0x2c] sm:$0xf]
  %v94 = vld [vmem:[%s1 + $0x30] sm:$0xf]
  %v95 = vld [vmem:[%s1 + $0x34] sm:$0xf]
  %v96 = vld [vmem:[%s1 + $0x38] sm:$0xf]
  %v97 = vld [vmem:[%s1 + $0x3c] sm:$0xf]
  %v98 = vld [vmem:[%s1 + $0x40] sm:$0xf]
  %v99 = vld [vmem:[%s1 + $0x44] sm:$0xf]
  %v100 = vld [vmem:[%s1 + $0x48] sm:$0xf]
  %v101 = vld [vmem:[%s1 + $0x4c] sm:$0xf]
  %v102 = vld [vmem:[%s1 + $0x50] sm:$0xf]
  %v103 = vld [vmem:[%s1 + $0x54] sm:$0xf]
  %v104 = vld [vmem:[%s1 + $0x58] sm:$0xf]
  %v105 = vld [vmem:[%s1 + $0x5c] sm:$0xf]
  %v106 = vld [vmem:[%s1 + $0x60] sm:$0xf]
  %v107 = vld [vmem:[%s1 + $0x64] sm:$0xf]
  %v108 = vld [vmem:[%s1 + $0x68] sm:$0xf]
  %v109 = vld [vmem:[%s1 + $0x6c] sm:$0xf]
  %v110 = vld [vmem:[%s1 + $0x70] sm:$0xf]
  %v111 = vld [vmem:[%s1 + $0x74] sm:$0xf]
  %v112 = vld [vmem:[%s1 + $0x78] sm:$0xf]
  %v113 = vld [vmem:[%s1 + $0x7c] sm:$0xf]
  %v114 = vld [vmem:[%s2] sm:$0x1]
  %v115 = vlaneseq
  %v116 = vshrl.u32 %v115, 7
  %v117 = vsub.s32 0, %v116
  %v118 = vrot.slane %v114, %v117
  %v151 = vunpack.c.l.b16 %v82
  %v152 = vunpack.c.l.b16 %v83
  %v153 = vunpack.c.l.b16 %v84
  %v154 = vunpack.c.l.b16 %v85
  %v155 = vunpack.c.l.b16 %v86
  %v156 = vunpack.c.l.b16 %v87
  %v157 = vunpack.c.l.b16 %v88
  %v158 = vunpack.c.l.b16 %v89
  %v159 = vunpack.c.l.b16 %v90
  %v160 = vunpack.c.l.b16 %v91
  %v161 = vunpack.c.l.b16 %v92
  %v162 = vunpack.c.l.b16 %v93
  %v163 = vunpack.c.l.b16 %v94
  %v164 = vunpack.c.l.b16 %v95
  %v165 = vunpack.c.l.b16 %v96
  %v166 = vunpack.c.l.b16 %v97
  %v167 = vunpack.c.l.b16 %v98
  %v168 = vunpack.c.l.b16 %v99
  %v169 = vunpack.c.l.b16 %v100
  %v170 = vunpack.c.l.b16 %v101
  %v171 = vunpack.c.l.b16 %v102
  %v172 = vunpack.c.l.b16 %v103
  %v173 = vunpack.c.l.b16 %v104
  %v174 = vunpack.c.l.b16 %v105
  %v175 = vunpack.c.l.b16 %v106
  %v176 = vunpack.c.l.b16 %v107
  %v177 = vunpack.c.l.b16 %v108
  %v178 = vunpack.c.l.b16 %v109
  %v179 = vunpack.c.l.b16 %v110
  %v180 = vunpack.c.l.b16 %v111
  %v181 = vunpack.c.l.b16 %v112
  %v182 = vunpack.c.l.b16 %v113
  %v183 = vpack.c.b16 %v152, %v151
  %v184 = vpack.c.b16 %v154, %v153
  %v185 = vpack.c.b16 %v156, %v155
  %v186 = vpack.c.b16 %v158, %v157
  %v187 = vpack.c.b16 %v160, %v159
  %v188 = vpack.c.b16 %v162, %v161
  %v189 = vpack.c.b16 %v164, %v163
  %v190 = vpack.c.b16 %v166, %v165
  %v191 = vpack.c.b16 %v168, %v167
  %v192 = vpack.c.b16 %v170, %v169
  %v193 = vpack.c.b16 %v172, %v171
  %v194 = vpack.c.b16 %v174, %v173
  %v195 = vpack.c.b16 %v176, %v175
  %v196 = vpack.c.b16 %v178, %v177
  %v197 = vpack.c.b16 %v180, %v179
  %v198 = vpack.c.b16 %v182, %v181
  %215 = vmatprep.subr.bf16.mxu0 0
  %216 = vmatpush1.bf16.msra.mxu0 %v190
  %217 = vmatprep.subr.bf16.mxu0 0
  %218 = vmatpush1.bf16.msra.mxu0 %v189
  %219 = vmatprep.subr.bf16.mxu0 0
  %220 = vmatpush1.bf16.msra.mxu0 %v188
  %221 = vmatprep.subr.bf16.mxu0 0
  %222 = vmatpush1.bf16.msra.mxu0 %v187
  %223 = vmatprep.subr.bf16.mxu0 0
  %224 = vmatpush1.bf16.msra.mxu0 %v186
  %225 = vmatprep.subr.bf16.mxu0 0
  %226 = vmatpush1.bf16.msra.mxu0 %v185
  %227 = vmatprep.subr.bf16.mxu0 0
  %228 = vmatpush1.bf16.msra.mxu0 %v184
  %229 = vmatprep.subr.bf16.mxu0 0
  %230 = vmatpush1.bf16.msra.mxu0 %v183
  %231 = vmatprep.subr.bf16.mxu0 0
  %232 = vmatpush2.bf16.msra.mxu0 %v198
  %233 = vmatprep.subr.bf16.mxu0 0
  %234 = vmatpush2.bf16.msra.mxu0 %v197
  %235 = vmatprep.subr.bf16.mxu0 0
  %236 = vmatpush2.bf16.msra.mxu0 %v196
  %237 = vmatprep.subr.bf16.mxu0 0
  %238 = vmatpush2.bf16.msra.mxu0 %v195
  %239 = vmatprep.subr.bf16.mxu0 0
  %240 = vmatpush2.bf16.msra.mxu0 %v194
  %241 = vmatprep.subr.bf16.mxu0 0
  %242 = vmatpush2.bf16.msra.mxu0 %v193
  %243 = vmatprep.subr.bf16.mxu0 0
  %244 = vmatpush2.bf16.msra.mxu0 %v192
  %245 = vmatprep.subr.bf16.mxu0 0
  %246 = vmatpush2.bf16.msra.mxu0 %v191
  %247 = vmatprep.mubr.bf16.mxu0 %v81
  %248 = vmatmul.mubr.bf16.gmra.mxu0 %v80
  %v249 = vpop.f32.mrf.mxu0
  %v250 = vadd.f32 %v118, %v249
  %v251 = vpop.f32.mrf.mxu0
  %v252 = vpop.f32.mrf.mxu0
  %v253 = vadd.f32 %v118, %v252
  %v254 = vpop.f32.mrf.mxu0
  %255 = vdwg.mxu0
  %vm256 = vcmp.gt.f32.partialorder %v250, 0.0
  %vm257 = vcmp.gt.f32.partialorder %v253, 0.0
  %v258 = vmul.f32 %v250, 0.01
  %v259 = vmul.f32 %v253, 0.01
  %v260 = vsel %vm256, %v250, %v258
  %v261 = vsel %vm257, %v253, %v259
  %v262 = vlaneseq
  %v263 = vshrl.u32 %v262, 7
  %v264 = vadd.s32 %v263, 8
  %vm265 = vcmp.lt.s32.totalorder %v263, 0
  %v266 = vsub.s32 0, %v263
  %v267 = vsel %vm265, %v266, %v263
  %v268 = vshrl.u32 %v267, 3
  %v269 = vand.u32 %v267, 7
  %v270 = vsub.s32 0, %v269
  %v271 = vsel %vm265, %v270, %v269
  %vm272 = vcmp.lt.s32.totalorder %v264, 0
  %v273 = vsub.s32 0, %v264
  %v274 = vsel %vm272, %v273, %v264
  %v275 = vshrl.u32 %v274, 3
  %v276 = vand.u32 %v274, 7
  %v277 = vsub.s32 0, %v276
  %v278 = vsel %vm272, %v277, %v276
  %vm279 = vcmp.ne.s32.totalorder %v271, 0
  %vm280 = vcmp.ne.s32.totalorder %v278, 0
  %vm281 = vcmp.lt.s32.totalorder %v271, 0
  %vm282 = vcmp.lt.s32.totalorder %v278, 0
  %vm283 = vmand %vm281, %vm279
  %vm284 = vmand %vm282, %vm280
  %v285 = vadd.s32 %v271, 8
  %v286 = vadd.s32 %v278, 8
  %v287 = vsel %vm283, %v285, %v271
  %v288 = vsel %vm284, %v286, %v278
  %vm289 = vcmp.ge.s32.totalorder %v18, 0
  %vm290 = vcmp.lt.s32.totalorder %v18, 16
  %vm291 = vmand %vm289, %vm290
  %v292 = vsel %vm291, 7, 8
  %vm293 = vcmp.ge.s32.totalorder %v18, 16
  %vm294 = vcmp.lt.s32.totalorder %v18, 32
  %vm295 = vmand %vm293, %vm294
  %v296 = vsel %vm295, 6, %v292
  %vm297 = vcmp.ge.s32.totalorder %v18, 32
  %vm298 = vcmp.lt.s32.totalorder %v18, 48
  %vm299 = vmand %vm297, %vm298
  %v300 = vsel %vm299, 5, %v296
  %vm301 = vcmp.lt.s32.totalorder %v287, %v300
  %vm302 = vcmp.lt.s32.totalorder %v288, %v300
  %v303 = vsel %vm301, %v260, -1e+30
  %v304 = vsel %vm302, %v261, -1e+30
  %vm305 = vcmask 523264
  %v306 = vsel %vm305, %v303, -inf
  %v307 = vrot.slane %v306, 4
  %v308 = vmax.f32 %v306, %v307
  %v309 = vrot.slane %v308, 2
  %v310 = vmax.f32 %v308, %v309
  %v311 = vrot.slane %v310, 1
  %v312 = vmax.f32 %v310, %v311
  %v313 = vsel %vm305, %v304, -inf
  %v314 = vrot.slane %v313, 4
  %v315 = vmax.f32 %v313, %v314
  %v316 = vrot.slane %v315, 2
  %v317 = vmax.f32 %v315, %v316
  %v318 = vrot.slane %v317, 1
  %v319 = vmax.f32 %v317, %v318
  %vm320 = vcmask 1040384
  %v321 = vsel %vm320, %v312, %v319
  %v322 = vld [vmem:[%s2 + $0x1] sm:$0x1]
  %v323 = vlaneseq
  %v324 = vshrl.u32 %v323, 7
  %v325 = vsub.s32 0, %v324
  %v326 = vrot.slane %v322, %v325
  %v327 = vmul.f32 %v321, %v326
  %vm328 = vcmask 517120
  %v329 = vsel %vm328, %v327, 0.0
  %330 = vadd.xlane.f32.xlu0 %v329
  %v331 = vpop.xlane.xlu0 %330
  %332 = vst [vmem:[%s3] sm:$0x3] %v331
  // Predicated region
  $region14: #{cnn_classifier_forward.1} parent=0 // pred_check
    _
  $region15: #{cnn_classifier_forward.1} parent=0 // pred_check_branch
    %334 = sbr.rel (0) target = $region17
  $region16: #{cnn_classifier_forward.1} parent=0 // pred_region
    _
  $region17: #{cnn_classifier_forward.1} parent=0 // pred_fallthru
    _
  // Predicated region
  $region18: #{cnn_classifier_forward.1} parent=0 // pred_check
    _
  $region19: #{cnn_classifier_forward.1} parent=0 // pred_check_branch
    %336 = sbr.rel (0) target = $region21
  $region20: #{cnn_classifier_forward.1} parent=0 // pred_region
    _
  $region21: #{cnn_classifier_forward.1} parent=0 // pred_fallthru
    _

</llo_original>
